<compile_context>
chip_gen: v7x
topology: tpu7x:2x2x1
jax: 0.10.0
libtpu: 0.0.40
codegen_flags: <defaults>
</compile_context>

<pallas_src>
import jax
import jax.numpy as jnp
from jax import lax
from jax.experimental import pallas as pl
from jax.experimental.pallas import tpu as pltpu


def folded_matvec_kernel(x_ref, w_ref, o_ref):
    # y_tile = w_eff . x_tile^T, expressed as a last-dim contraction of both operands:
    #   [1, D_in] x [TB, D_in] -> [1, TB]
    # No transpose/relayout is emitted for either operand, and the result lands with the batch
    # dimension in lanes, so the output store is lane-dense.
    o_ref[...] = lax.dot_general(
        w_ref[...], x_ref[...],
        dimension_numbers=(((1,), (1,)), ((), ())),
        preferred_element_type=jnp.float32,
    ).astype(o_ref.dtype)


def _batch_tile(B, D_in, itemsize, target_bytes=2 * 1024 * 1024):
    """Pick the batch tile: ~target_bytes of x per grid step, 128-row aligned."""
    rows = max(1, target_bytes // max(1, D_in * itemsize))
    tb = max(128, (rows // 128) * 128)
    if tb < B:
        return tb                      # large batch: MiB-scale tiles, grid >= 2
    if B > 256:
        # Mid-size batch: split into two aligned tiles so the "parallel" grid axis actually
        # spans both v7x TensorCores (no-op on single-TC v5e/v6e).
        half = ((B + 1) // 2 + 127) // 128 * 128
        if half < B:
            return half
    return B                           # small batch: one whole-batch tile (block == array dims)


def two_layer_net_select(x, idx, w1, b1, w2, b2):
    """Computes (Linear2(Linear1(x)))[:, idx] -> shape [B] (no activation, as in the module)."""
    B, D_in = x.shape
    width = w1.shape[0]
    num_tasks = w2.shape[0]

    b1 = jnp.asarray(b1, jnp.float32).reshape(width)
    b2 = jnp.asarray(b2, jnp.float32).reshape(num_tasks)

    # Validate/clamp the task index in the wrapper (no unchecked dynamic slicing in the kernel).
    idx = jnp.clip(jnp.asarray(idx, jnp.int32), 0, num_tasks - 1)

    # Algebraic fold (exact because forward() applies no activation between the layers).
    w2_row = lax.dynamic_slice_in_dim(w2, idx, 1, axis=0)               # [1, width]
    w_eff = w2_row.astype(jnp.float32) @ w1.astype(jnp.float32)         # [1, D_in]
    b_eff = jnp.dot(w2_row[0].astype(jnp.float32), b1) + b2[idx]        # scalar
    w_eff = w_eff.astype(x.dtype)

    tb = _batch_tile(B, D_in, jnp.dtype(x.dtype).itemsize)
    grid_b = pl.cdiv(B, tb)

    out = pl.pallas_call(
        folded_matvec_kernel,
        out_shape=jax.ShapeDtypeStruct((1, B), jnp.float32),
        grid_spec=pltpu.PrefetchScalarGridSpec(
            num_scalar_prefetch=0,
            grid=(grid_b,),
            in_specs=[
                pl.BlockSpec((tb, D_in), lambda i: (i, 0)),   # x: batch-tiled, double-buffered
                pl.BlockSpec((1, D_in), lambda i: (0, 0)),    # w_eff: tiny, VMEM-resident
            ],
            out_specs=pl.BlockSpec((1, tb), lambda i: (0, i)),  # lane-dense [1, TB] output blocks
        ),
        compiler_params=pltpu.CompilerParams(
            dimension_semantics=("parallel",),   # batch steps shard across v7x's two TCs
        ),
    )(x, w_eff)

    return out[0, :] + b_eff


def forward(x, idx, params):
    w1, b1, w2, b2 = params
    return two_layer_net_select(x, idx, w1, b1, w2, b2)


if __name__ == "__main__":
    # Small shapes consistent with the module: D_in=16, width=32, num_tasks=8, batch=8.
    B, D_in, width, num_tasks = 8, 16, 32, 8
    idx = 3

    key = jax.random.PRNGKey(0)
    kx, k1, kb1, k2, kb2 = jax.random.split(key, 5)

    x = jax.random.normal(kx, (B, D_in), dtype=jnp.float32)
    # PyTorch Linear convention: weights [out, in], biases [out].
    w1 = jax.random.normal(k1, (width, D_in), dtype=jnp.float32) * 0.1
    b1 = jax.random.normal(kb1, (width,), dtype=jnp.float32) * 0.1
    w2 = jax.random.normal(k2, (num_tasks, width), dtype=jnp.float32) * 0.1
    b2 = jax.random.normal(kb2, (num_tasks,), dtype=jnp.float32) * 0.1

    out = forward(x, idx, (w1, b1, w2, b2))
    jax.block_until_ready(out)

    # Reference check in plain JAX (same math as the PyTorch module's forward).
    ref = ((x @ w1.T + b1) @ w2.T + b2)[:, idx]
    assert out.shape == (B,)
    assert jnp.allclose(out, ref, atol=1e-5, rtol=1e-5), "mismatch vs reference"

    print("KERNEL_OK")
</pallas_src>

<mosaic_0001>
module attributes {stable_mosaic.version = 11 : i64} {
  func.func @folded_matvec_kernel(%arg0: i32, %arg1: memref<8x16xf32, #tpu.memory_space<vmem>>, %arg2: memref<1x16xf32, #tpu.memory_space<vmem>>, %arg3: memref<1x8xf32, #tpu.memory_space<vmem>>) attributes {dimension_semantics = [#tpu.dimension_semantics<parallel>], iteration_bounds = array<i64: 1>, scalar_prefetch = 0 : i64, scratch_operands = 0 : i64, tpu.core_type = #tpu.core_type<tc>, window_params = [{transform_indices = @transform_0, window_bounds = array<i64: 8, 16>}, {pipeline_mode = #tpu.pipeline_mode<synchronous>, transform_indices = @transform_1, window_bounds = array<i64: 1, 16>}, {transform_indices = @transform_2, window_bounds = array<i64: 1, 8>}]} {
    %c0 = arith.constant 0 : index
    %c0_0 = arith.constant 0 : index
    %0 = vector.load %arg2[%c0, %c0_0] : memref<1x16xf32, #tpu.memory_space<vmem>>, vector<1x16xf32>
    %c0_1 = arith.constant 0 : index
    %c0_2 = arith.constant 0 : index
    %1 = vector.load %arg1[%c0_1, %c0_2] : memref<8x16xf32, #tpu.memory_space<vmem>>, vector<8x16xf32>
    %cst = arith.constant dense<0.000000e+00> : vector<1x8xf32>
    %2 = tpu.matmul %0, %1, %cst {dimension_numbers = #tpu.dot_dimension_numbers<[1], [1], [0], [0], [0, 0, 1, 0], [], []>} : vector<1x16xf32>, vector<8x16xf32>, vector<1x8xf32> -> vector<1x8xf32>
    %c0_3 = arith.constant 0 : index
    %c0_4 = arith.constant 0 : index
    %3 = vector.load %arg3[%c0_3, %c0_4] : memref<1x8xf32, #tpu.memory_space<vmem>>, vector<1x8xf32>
    tpu.vector_store %arg3[%c0_3, %c0_4], %2 {strides = array<i32>} : memref<1x8xf32, #tpu.memory_space<vmem>>, vector<1x8xf32>,
    return
  }
  func.func @transform_0(%arg0: i32) -> (i32, i32) {
    %c0_i32 = arith.constant 0 : i32
    %c0_i32_0 = arith.constant 0 : i32
    return %arg0, %c0_i32 : i32, i32
  }
  func.func @transform_1(%arg0: i32) -> (i32, i32) {
    %c0_i32 = arith.constant 0 : i32
    %c0_i32_0 = arith.constant 0 : i32
    %c0_i32_1 = arith.constant 0 : i32
    return %c0_i32, %c0_i32_0 : i32, i32
  }
  func.func @transform_2(%arg0: i32) -> (i32, i32) {
    %c0_i32 = arith.constant 0 : i32
    %c0_i32_0 = arith.constant 0 : i32
    return %c0_i32, %arg0 : i32, i32
  }
}

</mosaic_0001>

<llo_original>
// kernel: tpu_custom_call.1
$region0: #{tpu_custom_call.1}
  #allocation0 [shape = 'u32[]', space=smem, size = 0x4, offset = 0x4, fixed_abs, tag = 'smem constant byte address 0x4 - core index']
  #allocation1 [shape = 'u32[144,128]{1,0:T(1,128)}', space=vmem, size = 0x12000, scoped, tag = 'internal scratch']
  %s0 = inlined_call_operand.hbm [shape: f32[8,16], index: 0, kind: input, shape index: {}]
  %s1 = inlined_call_operand.vmem [shape: f32[1,16], index: 1, kind: input, shape index: {}]
  %s2 = inlined_call_operand.hbm [shape: f32[1,8], index: 2, kind: output, shape index: {}]
  %s3 = sld [smem:[#allocation0]]
  $region22: #{tpu_custom_call.1} parent=0
    _
  %s5 = ssub.s32 1, %s3
  %s6 = scalar_select 0, %s5, %s3
  $region1: #{tpu_custom_call.1} parent=0
    #allocation2 [shape = 'u8[4096]{0}', space=vmem, size = 0x1000, scoped, tag = 'input window, operand 0, single buffered']
    #allocation3 [shape = 's32[1]{0}', space=sflag, size = 0x4, scoped, tag = 'scoped memory for tpu_custom_call.1']
    #allocation4 [shape = 's32[1]{0}', space=sflag, size = 0x4, scoped, tag = 'scoped memory for tpu_custom_call.1']
    #allocation5 [shape = 'u8[512]{0}', space=vmem, size = 0x400, scoped, tag = 'output window, operand 0, single buffered']
    %7 = vsyncpa [#allocation3], 0
    %8 = vsyncpa [#allocation4], 0
    // Predicated region
    $region2: #{tpu_custom_call.1} parent=1 // pred_check
      _
    $region3: #{tpu_custom_call.1} parent=1 // pred_check_branch
      %10 = sbr.rel (0) target = $region5
    $region4: #{tpu_custom_call.1} parent=1 // pred_region
      %s12 = ssub.s32 128, 128
      %13 = vsyncadd [#allocation3], %s12
      %s15 = sshll.u32 [#allocation2], 4
      %s16 = int_to_ptr.vmem [resolvable:$true] %s15
      %18 = dma.hbm_to_vmem [thread:$0]  %s0, 128, %s16, [#allocation3]
    $region5: #{tpu_custom_call.1} parent=1 // pred_fallthru
      _
    // Predicated region
    $region6: #{tpu_custom_call.1} parent=1 // pred_check
      _
    $region7: #{tpu_custom_call.1} parent=1 // pred_check_branch
      %20 = sbr.rel (0) target = $region9
    $region8: #{tpu_custom_call.1} parent=1 // pred_region
      _
    $region9: #{tpu_custom_call.1} parent=1 // pred_fallthru
      _
    // Predicated region
    $region10: #{tpu_custom_call.1} parent=1 // pred_check
      _
    $region11: #{tpu_custom_call.1} parent=1 // pred_check_branch
      %22 = sbr.rel (0) target = $region13
    $region12: #{tpu_custom_call.1} parent=1 // pred_region
      %23 = dma.done [#allocation3], 128
    $region13: #{tpu_custom_call.1} parent=1 // pred_fallthru
      _
    %v24 = vld [vmem:[%s1] sm:$0x1]
    %v25 = vld [vmem:[#allocation2] sm:$0xff]
    %vm26 = vcmask 130048
    %v28 = vsel %vm26, %v24, 0
    %v31 = vsel %vm26, %v25, 0
    %33 = vmatprep.subr.mxu0 0.0
    %34 = vmatpush1.xpose.msra.mxu0 %v31
    %35 = vmatprep.subr.mxu0 0.0
    %36 = vmatpush1.xpose.msra.mxu0 0.0
    %37 = vmatprep.subr.mxu0 0.0
    %38 = vmatpush1.xpose.msra.mxu0 0.0
    %39 = vmatprep.subr.mxu0 0.0
    %40 = vmatpush1.xpose.msra.mxu0 0.0
    %41 = vmatprep.subr.mxu0 0.0
    %42 = vmatpush1.xpose.msra.mxu0 0.0
    %43 = vmatprep.subr.mxu0 0.0
    %44 = vmatpush1.xpose.msra.mxu0 0.0
    %45 = vmatprep.subr.mxu0 0.0
    %46 = vmatpush1.xpose.msra.mxu0 0.0
    %47 = vmatprep.subr.mxu0 0.0
    %48 = vmatpush1.xpose.msra.mxu0 0.0
    %49 = vmatprep.subr.mxu0 0.0
    %50 = vmatpush1.xpose.msra.mxu0 0.0
    %51 = vmatprep.subr.mxu0 0.0
    %52 = vmatpush1.xpose.msra.mxu0 0.0
    %53 = vmatprep.subr.mxu0 0.0
    %54 = vmatpush1.xpose.msra.mxu0 0.0
    %55 = vmatprep.subr.mxu0 0.0
    %56 = vmatpush1.xpose.msra.mxu0 0.0
    %57 = vmatprep.subr.mxu0 0.0
    %58 = vmatpush1.xpose.msra.mxu0 0.0
    %59 = vmatprep.subr.mxu0 0.0
    %60 = vmatpush1.xpose.msra.mxu0 0.0
    %61 = vmatprep.subr.mxu0 0.0
    %62 = vmatpush1.xpose.msra.mxu0 0.0
    %63 = vmatprep.subr.mxu0 0.0
    %64 = vmatpush1.xpose.msra.mxu0 0.0
    %65 = vmatprep.subr.mxu0 0.0
    %66 = vmatpush1.xpose.msra.mxu0 0.0
    %67 = vmatprep.subr.mxu0 0.0
    %68 = vmatpush1.xpose.msra.mxu0 0.0
    %69 = vmatprep.subr.mxu0 0.0
    %70 = vmatpush1.xpose.msra.mxu0 0.0
    %71 = vmatprep.subr.mxu0 0.0
    %72 = vmatpush1.xpose.msra.mxu0 0.0
    %73 = vmatprep.subr.mxu0 0.0
    %74 = vmatpush1.xpose.msra.mxu0 0.0
    %75 = vmatprep.subr.mxu0 0.0
    %76 = vmatpush1.xpose.msra.mxu0 0.0
    %77 = vmatprep.subr.mxu0 0.0
    %78 = vmatpush1.xpose.msra.mxu0 0.0
    %79 = vmatprep.subr.mxu0 0.0
    %80 = vmatpush1.xpose.msra.mxu0 0.0
    %81 = vmatprep.subr.mxu0 0.0
    %82 = vmatpush1.xpose.msra.mxu0 0.0
    %83 = vmatprep.subr.mxu0 0.0
    %84 = vmatpush1.xpose.msra.mxu0 0.0
    %85 = vmatprep.subr.mxu0 0.0
    %86 = vmatpush1.xpose.msra.mxu0 0.0
    %87 = vmatprep.subr.mxu0 0.0
    %88 = vmatpush1.xpose.msra.mxu0 0.0
    %89 = vmatprep.subr.mxu0 0.0
    %90 = vmatpush1.xpose.msra.mxu0 0.0
    %91 = vmatprep.subr.mxu0 0.0
    %92 = vmatpush1.xpose.msra.mxu0 0.0
    %93 = vmatprep.subr.mxu0 0.0
    %94 = vmatpush1.xpose.msra.mxu0 0.0
    %95 = vmatprep.subr.mxu0 0.0
    %96 = vmatpush1.xpose.msra.mxu0 0.0
    %97 = vmatprep.mubr.f32.mxu0 0.0
    %98 = vmatmul.mubr.f32.gmra.mrb[0].mxu0 %v28
    %v99 = vpop.f32.mrb[0].mxu0
    %v100 = vadd.f32 0.0, %v99
    %v101 = vpop.f32.mrb[0].mxu0
    %102 = vdwg.mxu0
    %vm103 = vcmask 57344
    %104 = vst.msk [vmem:[#allocation5] sm:$0x1] %vm103, %v100
    // Predicated region
    $region14: #{tpu_custom_call.1} parent=1 // pred_check
      _
    $region15: #{tpu_custom_call.1} parent=1 // pred_check_branch
      %106 = sbr.rel (0) target = $region17
    $region16: #{tpu_custom_call.1} parent=1 // pred_region
      %s108 = ssub.s32 16, 16
      %109 = vsyncadd [#allocation4], %s108
      %s111 = sshll.u32 [#allocation5], 4
      %s112 = int_to_ptr.vmem [resolvable:$true] %s111
      %114 = dma.vmem_to_hbm [thread:$0]  %s112, 16, %s2, [#allocation4]
    $region17: #{tpu_custom_call.1} parent=1 // pred_fallthru
      _
    // Predicated region
    $region18: #{tpu_custom_call.1} parent=1 // pred_check
      _
    $region19: #{tpu_custom_call.1} parent=1 // pred_check_branch
      %116 = sbr.rel (0) target = $region21
    $region20: #{tpu_custom_call.1} parent=1 // pred_region
      %117 = dma.done [#allocation4], 16
    $region21: #{tpu_custom_call.1} parent=1 // pred_fallthru
      _
    %118 = vsyncpa [#allocation3], 1
    %119 = vsyncpa [#allocation4], 1

</llo_original>
